<compile_context>
chip_gen: v6e
topology: v6e:2x2x1
jax: 0.10.0
libtpu: 0.0.40
codegen_flags: <defaults>
</compile_context>

<pallas_src>
import jax
import jax.numpy as jnp
from jax.experimental import pallas as pl
from jax.experimental.pallas import tpu as pltpu

MIN_FREQ = 0.0001


# ---------------------------------------------------------------------------
# Pallas kernel: 1x1 conv == single matmul over the channel axis, emitted
# directly in channel-first (NCHW-compatible) layout:  (Cout, HW).
# Runs ONCE (no grid) on the batch-invariant positional buffer.
# ---------------------------------------------------------------------------
def _conv1x1_chw_kernel(w_ref, x_ref, o_ref):
    # w_ref: (Cout, Cin)  x_ref: (Cin, HW)  o_ref: (Cout, HW)
    o_ref[...] = jnp.dot(
        w_ref[...], x_ref[...], preferred_element_type=jnp.float32
    ).astype(o_ref.dtype)


def conv1x1_pallas_chw_once(weight_cout_cin, x_cin_hw):
    """weight: (Cout, Cin) f32; x: (Cin, HW) f32 -> (Cout, HW) f32.

    Single grid-less call: all operands live in VMEM (~3 KiB total), one MXU
    push, one store.  No per-batch grid, no HBM broadcast materialization.
    # TODO(synk): if patch_hwCh / num_freqs are ever scaled up, pad the output
    # last dim (HW) to a multiple of 128 lanes for unmasked vst stores.
    """
    Cout, Cin = weight_cout_cin.shape
    HW = x_cin_hw.shape[1]
    return pl.pallas_call(
        _conv1x1_chw_kernel,
        out_shape=jax.ShapeDtypeStruct((Cout, HW), jnp.float32),
        in_specs=[
            pl.BlockSpec(memory_space=pltpu.MemorySpace.VMEM),
            pl.BlockSpec(memory_space=pltpu.MemorySpace.VMEM),
        ],
        out_specs=pl.BlockSpec(memory_space=pltpu.MemorySpace.VMEM),
    )(weight_cout_cin, x_cin_hw)


# ---------------------------------------------------------------------------
# Fixed positional buffer (matches PyTorch __init__), channel-first:
#   enc[c, hw] = cos(hw * freqs[c]) if c even else sin(hw * freqs[c])
# ---------------------------------------------------------------------------
def build_positional_net_out_chw(H, W, num_freqs):
    freqs = MIN_FREQ ** (
        2.0 * jnp.floor_divide(jnp.arange(num_freqs, dtype=jnp.float32), 2.0)
        / float(num_freqs)
    )  # (num_freqs,)
    raster_idx = jnp.arange(H * W, dtype=jnp.float32)[None, :]      # (1, HW)
    obs = freqs[:, None] * raster_idx                                # (Cin, HW)
    even = (jnp.arange(num_freqs) % 2) == 0
    enc = jnp.where(even[:, None], jnp.cos(obs), jnp.sin(obs))       # (Cin, HW)
    return enc.astype(jnp.float32)


# ---------------------------------------------------------------------------
# Module equivalent
# ---------------------------------------------------------------------------
class PatchPositionalNetPallas:
    def __init__(self, patch_hwCh=(4, 4, 32), num_freqs_for_sinusoidal=16, seed=0):
        self.H, self.W, self.Cout = patch_hwCh
        self.Cin = num_freqs_for_sinusoidal  # num_freqs * n_positional_obs (=1)

        # TODO(synk): weight is a deterministic synthetic init (kaiming-uniform
        # like), not trained PyTorch weights; load real weights for parity tests.
        key = jax.random.PRNGKey(seed)
        bound = 1.0 / jnp.sqrt(float(self.Cin))
        self.weight = jax.random.uniform(
            key, (self.Cout, self.Cin), dtype=jnp.float32,
            minval=-bound, maxval=bound,
        )  # (Cout, Cin) -- same layout as a 1x1 Conv2d weight (squeezed)

        # Fixed positional buffer, channel-first raster order (Cin, HW).
        self.pos_enc_chw = build_positional_net_out_chw(self.H, self.W, self.Cin)

        # Batch-invariant 1x1 conv computed ONCE at construction time
        # (hoisted out of forward per perf review).  Output already in
        # channel-first layout so the reshape below is a zero-copy view.
        y = conv1x1_pallas_chw_once(self.weight, self.pos_enc_chw)   # (Cout, HW)
        self._cached_out_chw = jax.block_until_ready(
            y.reshape(self.Cout, self.H, self.W)                     # (Cout, H, W)
        )

    @property
    def n_out_feats(self):
        return self.Cout

    def forward(self, observations):
        positional_obs = observations["positional_obs"]
        B = positional_obs.shape[0]
        # Pure broadcast over the batch (matches .repeat in PyTorch); XLA either
        # fuses this into the consumer (free) or fills HBM at roofline.
        return jnp.broadcast_to(
            self._cached_out_chw[None], (B, self.Cout, self.H, self.W)
        )


# ---------------------------------------------------------------------------
# Reference (pure JAX) for correctness checking
# ---------------------------------------------------------------------------
def reference_forward(net: PatchPositionalNetPallas, observations):
    B = observations["positional_obs"].shape[0]
    pos = net.pos_enc_chw.reshape(net.Cin, net.H, net.W)             # (Cin, H, W)
    pos = jnp.broadcast_to(pos[None], (B, net.Cin, net.H, net.W))
    # 1x1 conv, NCHW: out[b,o,h,w] = sum_c W[o,c] * pos[b,c,h,w]
    return jnp.einsum("oc,bchw->bohw", net.weight, pos)


if __name__ == "__main__":
    # Small config: patch_hwCh = (4, 4, 32), num_freqs_for_sinusoidal = 16
    net = PatchPositionalNetPallas(patch_hwCh=(4, 4, 32),
                                   num_freqs_for_sinusoidal=16, seed=0)

    key = jax.random.PRNGKey(0)
    B = 2
    # forward() only reads the batch dim of positional_obs; give it a plausible shape
    positional_obs = jax.random.normal(key, (B, 1, 4, 4), dtype=jnp.float32)
    observations = {"positional_obs": positional_obs}

    out = net.forward(observations)
    out = jax.block_until_ready(out)

    ref = jax.block_until_ready(reference_forward(net, observations))

    assert out.shape == (B, 32, 4, 4), out.shape
    assert out.dtype == jnp.float32
    assert jnp.allclose(out, ref, atol=1e-5, rtol=1e-5), "mismatch vs reference"

    print("KERNEL_OK")
</pallas_src>

<mosaic_0001>
module attributes {stable_mosaic.version = 11 : i64} {
  func.func @_conv1x1_chw_kernel(%arg0: memref<32x16xf32, #tpu.memory_space<vmem>>, %arg1: memref<16x16xf32, #tpu.memory_space<vmem>>, %arg2: memref<32x16xf32, #tpu.memory_space<vmem>>) attributes {dimension_semantics = [], scalar_prefetch = 0 : i64, scratch_operands = 0 : i64, tpu.core_type = #tpu.core_type<tc>} {
    %c0 = arith.constant 0 : index
    %c0_0 = arith.constant 0 : index
    %0 = vector.load %arg0[%c0, %c0_0] : memref<32x16xf32, #tpu.memory_space<vmem>>, vector<32x16xf32>
    %c0_1 = arith.constant 0 : index
    %c0_2 = arith.constant 0 : index
    %1 = vector.load %arg1[%c0_1, %c0_2] : memref<16x16xf32, #tpu.memory_space<vmem>>, vector<16x16xf32>
    %cst = arith.constant dense<0.000000e+00> : vector<32x16xf32>
    %2 = tpu.matmul %0, %1, %cst {dimension_numbers = #tpu.dot_dimension_numbers<[1], [0], [0], [1], [0, 0, 1, 1], [], []>} : vector<32x16xf32>, vector<16x16xf32>, vector<32x16xf32> -> vector<32x16xf32>
    %c0_3 = arith.constant 0 : index
    %c0_4 = arith.constant 0 : index
    %3 = vector.load %arg2[%c0_3, %c0_4] : memref<32x16xf32, #tpu.memory_space<vmem>>, vector<32x16xf32>
    tpu.vector_store %arg2[%c0_3, %c0_4], %2 {strides = array<i32>} : memref<32x16xf32, #tpu.memory_space<vmem>>, vector<32x16xf32>,
    return
  }
}

</mosaic_0001>

<llo_original>
// kernel: tpu_custom_call.1
$region0: #{tpu_custom_call.1}
  #allocation0 [shape = 'u32[]', space=smem, size = 0x4, offset = 0x4, fixed_abs, tag = 'smem constant byte address 0x4 - core index']
  #allocation1 [shape = 'u32[144,128]{1,0:T(1,128)}', space=vmem, size = 0x12000, scoped, tag = 'internal scratch']
  %s0 = inlined_call_operand.vmem [shape: f32[32,16], index: 0, kind: input, shape index: {}]
  %s1 = inlined_call_operand.vmem [shape: f32[16,16], index: 1, kind: input, shape index: {}]
  %s2 = inlined_call_operand.vmem [shape: f32[32,16], index: 2, kind: output, shape index: {}]
  %s3 = sld [smem:[#allocation0]]
  $region18: #{tpu_custom_call.1} parent=0
    _
  %s5 = ssub.s32 1, %s3
  %s6 = scalar_select 0, %s5, %s3
  // Predicated region
  $region2: #{tpu_custom_call.1} parent=0 // pred_check
    _
  $region3: #{tpu_custom_call.1} parent=0 // pred_check_branch
    %8 = sbr.rel (0) target = $region5
  $region4: #{tpu_custom_call.1} parent=0 // pred_region
    _
  $region5: #{tpu_custom_call.1} parent=0 // pred_fallthru
    _
  // Predicated region
  $region6: #{tpu_custom_call.1} parent=0 // pred_check
    _
  $region7: #{tpu_custom_call.1} parent=0 // pred_check_branch
    %10 = sbr.rel (0) target = $region9
  $region8: #{tpu_custom_call.1} parent=0 // pred_region
    _
  $region9: #{tpu_custom_call.1} parent=0 // pred_fallthru
    _
  %v11 = vld [vmem:[%s0] sm:$0xff]
  %v12 = vld [vmem:[%s0 + $0x8] sm:$0xff]
  %v13 = vld [vmem:[%s0 + $0x10] sm:$0xff]
  %v14 = vld [vmem:[%s0 + $0x18] sm:$0xff]
  %v15 = vld [vmem:[%s1] sm:$0xff]
  %v16 = vld [vmem:[%s1 + $0x8] sm:$0xff]
  %vm17 = vcmask 130048
  %v19 = vsel %vm17, %v11, 0
  %v22 = vsel %vm17, %v12, 0
  %v25 = vsel %vm17, %v13, 0
  %v28 = vsel %vm17, %v14, 0
  %30 = vmatprep.subr.mxu0 0.0
  %31 = vmatpush1.msra.mxu0 0.0
  %32 = vmatprep.subr.mxu0 0.0
  %33 = vmatpush1.msra.mxu0 0.0
  %34 = vmatprep.subr.mxu0 0.0
  %35 = vmatpush1.msra.mxu0 0.0
  %36 = vmatprep.subr.mxu0 0.0
  %37 = vmatpush1.msra.mxu0 0.0
  %38 = vmatprep.subr.mxu0 0.0
  %39 = vmatpush1.msra.mxu0 0.0
  %40 = vmatprep.subr.mxu0 0.0
  %41 = vmatpush1.msra.mxu0 0.0
  %42 = vmatprep.subr.mxu0 0.0
  %43 = vmatpush1.msra.mxu0 0.0
  %44 = vmatprep.subr.mxu0 0.0
  %45 = vmatpush1.msra.mxu0 0.0
  %46 = vmatprep.subr.mxu0 0.0
  %47 = vmatpush1.msra.mxu0 0.0
  %48 = vmatprep.subr.mxu0 0.0
  %49 = vmatpush1.msra.mxu0 0.0
  %50 = vmatprep.subr.mxu0 0.0
  %51 = vmatpush1.msra.mxu0 0.0
  %52 = vmatprep.subr.mxu0 0.0
  %53 = vmatpush1.msra.mxu0 0.0
  %54 = vmatprep.subr.mxu0 0.0
  %55 = vmatpush1.msra.mxu0 0.0
  %56 = vmatprep.subr.mxu0 0.0
  %57 = vmatpush1.msra.mxu0 0.0
  %58 = vmatprep.subr.mxu0 0.0
  %59 = vmatpush1.msra.mxu0 %v16
  %60 = vmatprep.subr.mxu0 0.0
  %61 = vmatpush1.msra.mxu0 %v15
  %62 = vmatprep.subr.mxu0 0.0
  %63 = vmatpush2.msra.mxu0 0.0
  %64 = vmatprep.subr.mxu0 0.0
  %65 = vmatpush2.msra.mxu0 0.0
  %66 = vmatprep.subr.mxu0 0.0
  %67 = vmatpush2.msra.mxu0 0.0
  %68 = vmatprep.subr.mxu0 0.0
  %69 = vmatpush2.msra.mxu0 0.0
  %70 = vmatprep.subr.mxu0 0.0
  %71 = vmatpush2.msra.mxu0 0.0
  %72 = vmatprep.subr.mxu0 0.0
  %73 = vmatpush2.msra.mxu0 0.0
  %74 = vmatprep.subr.mxu0 0.0
  %75 = vmatpush2.msra.mxu0 0.0
  %76 = vmatprep.subr.mxu0 0.0
  %77 = vmatpush2.msra.mxu0 0.0
  %78 = vmatprep.subr.mxu0 0.0
  %79 = vmatpush2.msra.mxu0 0.0
  %80 = vmatprep.subr.mxu0 0.0
  %81 = vmatpush2.msra.mxu0 0.0
  %82 = vmatprep.subr.mxu0 0.0
  %83 = vmatpush2.msra.mxu0 0.0
  %84 = vmatprep.subr.mxu0 0.0
  %85 = vmatpush2.msra.mxu0 0.0
  %86 = vmatprep.subr.mxu0 0.0
  %87 = vmatpush2.msra.mxu0 0.0
  %88 = vmatprep.subr.mxu0 0.0
  %89 = vmatpush2.msra.mxu0 0.0
  %90 = vmatprep.subr.mxu0 0.0
  %91 = vmatpush2.msra.mxu0 0.0
  %92 = vmatprep.subr.mxu0 0.0
  %93 = vmatpush2.msra.mxu0 0.0
  %94 = vmatprep.mubr.f32.mxu0 0.0
  %95 = vmatmul.mubr.f32.gmra.mxu0 %v19
  %v96 = vpop.f32.mrf.mxu0
  %v97 = vadd.f32 0.0, %v96
  %v98 = vpop.f32.mrf.mxu0
  %99 = vmatprep.mubr.f32.mxu0 0.0
  %100 = vmatmul.mubr.f32.gmra.mxu0 %v22
  %v101 = vpop.f32.mrf.mxu0
  %v102 = vadd.f32 0.0, %v101
  %v103 = vpop.f32.mrf.mxu0
  %104 = vmatprep.mubr.f32.mxu0 0.0
  %105 = vmatmul.mubr.f32.gmra.mxu0 %v25
  %v106 = vpop.f32.mrf.mxu0
  %v107 = vadd.f32 0.0, %v106
  %v108 = vpop.f32.mrf.mxu0
  %109 = vmatprep.mubr.f32.mxu0 0.0
  %110 = vmatmul.mubr.f32.gmra.mxu0 %v28
  %v111 = vpop.f32.mrf.mxu0
  %v112 = vadd.f32 0.0, %v111
  %v113 = vpop.f32.mrf.mxu0
  %114 = vdwg.mxu0
  %115 = vst.msk [vmem:[%s2] sm:$0xff] %vm17, %v97
  %116 = vst.msk [vmem:[%s2 + $0x8] sm:$0xff] %vm17, %v102
  %117 = vst.msk [vmem:[%s2 + $0x10] sm:$0xff] %vm17, %v107
  %118 = vst.msk [vmem:[%s2 + $0x18] sm:$0xff] %vm17, %v112
  // Predicated region
  $region10: #{tpu_custom_call.1} parent=0 // pred_check
    _
  $region11: #{tpu_custom_call.1} parent=0 // pred_check_branch
    %120 = sbr.rel (0) target = $region13
  $region12: #{tpu_custom_call.1} parent=0 // pred_region
    _
  $region13: #{tpu_custom_call.1} parent=0 // pred_fallthru
    _
  // Predicated region
  $region14: #{tpu_custom_call.1} parent=0 // pred_check
    _
  $region15: #{tpu_custom_call.1} parent=0 // pred_check_branch
    %122 = sbr.rel (0) target = $region17
  $region16: #{tpu_custom_call.1} parent=0 // pred_region
    _
  $region17: #{tpu_custom_call.1} parent=0 // pred_fallthru
    _

</llo_original>
